<compile_context>
chip_gen: v6e
topology: v6e:2x2x1
jax: 0.10.0
libtpu: 0.0.40
codegen_flags: <defaults>
</compile_context>

<pallas_src>
import functools
import math

import jax
import jax.numpy as jnp
from jax.experimental import pallas as pl
from jax.experimental.pallas import tpu as pltpu


def _round_up(x, m):
    return (x + m - 1) // m * m


def _pad2(a, rows, cols):
    a = jnp.asarray(a, jnp.float32)
    out = jnp.zeros((rows, cols), jnp.float32)
    return out.at[: a.shape[0], : a.shape[1]].set(a)


# --------------------------------------------------------------------------
# Kernel 1: per-row-panel feature transform   XW = ((X * d) @ W)  -> bf16
# --------------------------------------------------------------------------
def _feat_kernel(x_ref, d_ref, w_ref, o_ref):
    xk = x_ref[...] * d_ref[...]                                   # (TM, Fi) VPU
    xw = jnp.dot(xk, w_ref[...], preferred_element_type=jnp.float32)
    o_ref[...] = xw.astype(o_ref.dtype)                            # lane-dense bf16


def _feature_transform(x, d, w, *, tm):
    n_pad, f_in = x.shape
    f_out = w.shape[1]
    return pl.pallas_call(
        _feat_kernel,
        out_shape=jax.ShapeDtypeStruct((n_pad, f_out), jnp.bfloat16),
        grid_spec=pltpu.PrefetchScalarGridSpec(
            num_scalar_prefetch=0,
            grid=(n_pad // tm,),
            in_specs=[
                pl.BlockSpec((tm, f_in), lambda i: (i, 0)),        # X row panel
                pl.BlockSpec((tm, 1), lambda i: (i, 0)),           # D^-1/2 (rows)
                pl.BlockSpec((f_in, f_out), lambda i: (0, 0)),     # W (resident)
            ],
            out_specs=pl.BlockSpec((tm, f_out), lambda i: (i, 0)),
        ),
        compiler_params=pltpu.CompilerParams(
            dimension_semantics=("parallel",)),
    )(x, d, w)


# --------------------------------------------------------------------------
# Kernel 2: adjacency aggregation   out = relu?( D^-1/2 (A+I) XW + b )
# --------------------------------------------------------------------------
def _agg_kernel(a_ref, xw_ref, dm_ref, b_ref, o_ref, acc_ref, *, apply_relu):
    """a_ref: (TM,TK) bf16 raw (A+I); xw_ref: (TK,Fo) bf16; acc_ref: (TM,Fo) f32."""
    k = pl.program_id(1)

    @pl.when(k == 0)
    def _():
        acc_ref[...] = jnp.zeros_like(acc_ref)

    acc_ref[...] += jnp.dot(a_ref[...], xw_ref[...],
                            preferred_element_type=jnp.float32)

    @pl.when(k == pl.num_programs(1) - 1)
    def _():
        y = acc_ref[...] * dm_ref[...] + b_ref[...]
        if apply_relu:
            y = jnp.maximum(y, 0.0)
        o_ref[...] = y.astype(o_ref.dtype)


def _aggregate(a_bf16, xw, d, b, *, apply_relu, tm, tk):
    n_pad = a_bf16.shape[0]
    f_out = xw.shape[1]
    grid = (n_pad // tm, n_pad // tk)

    flops = 2 * n_pad * n_pad * f_out
    bytes_accessed = (n_pad * n_pad * 2                 # adjacency, bf16
                      + grid[0] * n_pad * f_out * 2     # streamed XW panels
                      + n_pad * (f_out * 4 + 4)         # output + degree
                      + f_out * 4)                      # bias

    kernel = functools.partial(_agg_kernel, apply_relu=apply_relu)
    return pl.pallas_call(
        kernel,
        out_shape=jax.ShapeDtypeStruct((n_pad, f_out), jnp.float32),
        grid_spec=pltpu.PrefetchScalarGridSpec(
            num_scalar_prefetch=0,
            grid=grid,
            in_specs=[
                pl.BlockSpec((tm, tk), lambda i, k: (i, k)),       # (A+I) panel
                pl.BlockSpec((tk, f_out), lambda i, k: (k, 0)),    # XW panel (bf16)
                pl.BlockSpec((tm, 1), lambda i, k: (i, 0)),        # D^-1/2 (dest rows)
                pl.BlockSpec((1, f_out), lambda i, k: (0, 0)),     # bias
            ],
            out_specs=pl.BlockSpec((tm, f_out), lambda i, k: (i, 0)),
            scratch_shapes=[pltpu.VMEM((tm, f_out), jnp.float32)],
        ),
        compiler_params=pltpu.CompilerParams(
            dimension_semantics=("parallel", "arbitrary")),
        cost_estimate=pl.CostEstimate(
            flops=flops, transcendentals=0, bytes_accessed=bytes_accessed),
    )(a_bf16, xw, d, b)


def _gcn_layer(a_bf16, x, d, w, b, *, apply_relu, tm, tk):
    xw = _feature_transform(x, d, w, tm=tm)
    return _aggregate(a_bf16, xw, d, b, apply_relu=apply_relu, tm=tm, tk=tk)


# --------------------------------------------------------------------------
# Forward pass wrapper (matches simpleGNN: GCNConv -> ReLU -> GCNConv)
# --------------------------------------------------------------------------
def simple_gnn_forward(x, edge_index, w1, b1, w2, b2, *, tm=256, tk=512):
    x = jnp.asarray(x, jnp.float32)
    n, f_in = x.shape
    f_hid = w1.shape[1]
    f_out = w2.shape[1]

    # ---- tile plan: 128-aligned, clamped for small graphs ----
    tm = min(tm, _round_up(n, 128))
    tk = min(tk, _round_up(n, 128))
    n_pad = _round_up(n, math.lcm(tm, tk))
    fi_p = _round_up(f_in, 128)    # MXU-friendly contraction width
    fh_p = _round_up(f_hid, 128)   # lane-dense hidden width
    fo_p = _round_up(f_out, 128)   # lane-dense output (no masked vst)

    # ---- glue: raw A+I in bf16 (exact 0/1) + D^{-1/2} per node ----
    src = edge_index[0].astype(jnp.int32)
    dst = edge_index[1].astype(jnp.int32)
    a_hat = jnp.zeros((n_pad, n_pad), jnp.float32).at[dst, src].set(1.0)
    diag = jnp.arange(n)
    a_hat = a_hat.at[diag, diag].add(1.0)            # self loops (real nodes only)
    deg = jnp.sum(a_hat, axis=1)
    d = jnp.where(deg > 0, jax.lax.rsqrt(deg), 0.0).reshape(n_pad, 1)
    a_bf16 = a_hat.astype(jnp.bfloat16)

    # ---- zero-padded features / parameters (layout plumbing only) ----
    x_p = _pad2(x, n_pad, fi_p)
    w1_p = _pad2(w1, fi_p, fh_p)
    b1_p = _pad2(jnp.asarray(b1, jnp.float32).reshape(1, -1), 1, fh_p)
    w2_p = _pad2(w2, fh_p, fo_p)
    b2_p = _pad2(jnp.asarray(b2, jnp.float32).reshape(1, -1), 1, fo_p)

    # ---- layer 1: GCNConv(f_in -> f_hid) + ReLU ----
    h1 = _gcn_layer(a_bf16, x_p, d, w1_p, b1_p, apply_relu=True, tm=tm, tk=tk)
    # ---- layer 2: GCNConv(f_hid -> 1); h1 round-trips through HBM ----
    out_p = _gcn_layer(a_bf16, h1, d, w2_p, b2_p, apply_relu=False, tm=tm, tk=tk)

    return out_p[:n, :f_out]


def _reference_forward(x, edge_index, w1, b1, w2, b2):
    """Pure-JAX f32 reference of the original module."""
    x = x.astype(jnp.float32)
    n = x.shape[0]
    a = jnp.zeros((n, n), jnp.float32).at[edge_index[1], edge_index[0]].set(1.0)
    a_hat = a + jnp.eye(n, dtype=jnp.float32)
    deg = jnp.sum(a_hat, axis=1)
    dis = jnp.where(deg > 0, 1.0 / jnp.sqrt(deg), 0.0)
    adj = dis[:, None] * a_hat * dis[None, :]
    h1 = jnp.maximum(adj @ (x @ w1) + b1, 0.0)
    return adj @ (h1 @ w2) + b2


def init_params(key, num_of_feat, f):
    """Deterministic glorot-style init matching GCNConv(in->f) and GCNConv(f->1)."""
    k1, k2 = jax.random.split(key)
    s1 = jnp.sqrt(6.0 / (num_of_feat + f))
    s2 = jnp.sqrt(6.0 / (f + 1))
    w1 = jax.random.uniform(k1, (num_of_feat, f), jnp.float32, -s1, s1)
    b1 = jnp.zeros((1, f), jnp.float32)
    w2 = jax.random.uniform(k2, (f, 1), jnp.float32, -s2, s2)
    b2 = jnp.zeros((1, 1), jnp.float32)
    return w1, b1, w2, b2


if __name__ == "__main__":
    key = jax.random.PRNGKey(0)
    k_x, k_p = jax.random.split(key)

    num_nodes = 16
    num_of_feat = 8
    f = 32

    # Node features
    x = jax.random.normal(k_x, (num_nodes, num_of_feat), jnp.float32)

    # Deterministic small graph: bidirectional ring + a few chords, shape (2, E)
    ring_src = jnp.arange(num_nodes)
    ring_dst = (ring_src + 1) % num_nodes
    chord_src = jnp.array([0, 3, 5, 8], jnp.int32)
    chord_dst = jnp.array([7, 12, 10, 15], jnp.int32)
    src = jnp.concatenate([ring_src, ring_dst, chord_src, chord_dst]).astype(jnp.int32)
    dst = jnp.concatenate([ring_dst, ring_src, chord_dst, chord_src]).astype(jnp.int32)
    edge_index = jnp.stack([src, dst], axis=0)                     # (2, E)

    w1, b1, w2, b2 = init_params(k_p, num_of_feat, f)

    out = simple_gnn_forward(x, edge_index, w1, b1, w2, b2)
    out = jax.block_until_ready(out)
    assert out.shape == (num_nodes, 1)

    # Loose check vs. pure-f32 reference (kernel streams bf16 adjacency / XW).
    ref = _reference_forward(x, edge_index, w1, b1, w2, b2)
    err = float(jnp.max(jnp.abs(out - ref)))
    scale = float(jnp.max(jnp.abs(ref))) + 1.0
    assert err <= 5e-2 * scale, f"max abs err {err} vs scale {scale}"

    print("KERNEL_OK")
</pallas_src>

<mosaic_0001>
module attributes {stable_mosaic.version = 11 : i64} {
  func.func @_feat_kernel(%arg0: i32, %arg1: memref<128x128xf32, #tpu.memory_space<vmem>>, %arg2: memref<128x1xf32, #tpu.memory_space<vmem>>, %arg3: memref<128x128xf32, #tpu.memory_space<vmem>>, %arg4: memref<128x128xbf16, #tpu.memory_space<vmem>>) attributes {dimension_semantics = [#tpu.dimension_semantics<parallel>], iteration_bounds = array<i64: 1>, scalar_prefetch = 0 : i64, scratch_operands = 0 : i64, tpu.core_type = #tpu.core_type<tc>, window_params = [{transform_indices = @transform_0, window_bounds = array<i64: 128, 128>}, {transform_indices = @transform_1, window_bounds = array<i64: 128, 1>}, {pipeline_mode = #tpu.pipeline_mode<synchronous>, transform_indices = @transform_2, window_bounds = array<i64: 128, 128>}, {transform_indices = @transform_3, window_bounds = array<i64: 128, 128>}]} {
    %c0 = arith.constant 0 : index
    %c0_0 = arith.constant 0 : index
    %0 = vector.load %arg1[%c0, %c0_0] : memref<128x128xf32, #tpu.memory_space<vmem>>, vector<128x128xf32>
    %c0_1 = arith.constant 0 : index
    %c0_2 = arith.constant 0 : index
    %1 = vector.load %arg2[%c0_1, %c0_2] : memref<128x1xf32, #tpu.memory_space<vmem>>, vector<128x1xf32>
    %2 = vector.broadcast %1 : vector<128x1xf32> to vector<128x128xf32>
    %3 = arith.mulf %0, %2 : vector<128x128xf32>
    %c0_3 = arith.constant 0 : index
    %c0_4 = arith.constant 0 : index
    %4 = vector.load %arg3[%c0_3, %c0_4] : memref<128x128xf32, #tpu.memory_space<vmem>>, vector<128x128xf32>
    %cst = arith.constant dense<0.000000e+00> : vector<128x128xf32>
    %5 = tpu.matmul %3, %4, %cst {dimension_numbers = #tpu.dot_dimension_numbers<[1], [0], [0], [1], [0, 0, 1, 1], [], []>} : vector<128x128xf32>, vector<128x128xf32>, vector<128x128xf32> -> vector<128x128xf32>
    %6 = arith.truncf %5 : vector<128x128xf32> to vector<128x128xbf16>
    %c0_5 = arith.constant 0 : index
    %c0_6 = arith.constant 0 : index
    %7 = vector.load %arg4[%c0_5, %c0_6] : memref<128x128xbf16, #tpu.memory_space<vmem>>, vector<128x128xbf16>
    tpu.vector_store %arg4[%c0_5, %c0_6], %6 {strides = array<i32>} : memref<128x128xbf16, #tpu.memory_space<vmem>>, vector<128x128xbf16>,
    return
  }
  func.func @transform_0(%arg0: i32) -> (i32, i32) {
    %c0_i32 = arith.constant 0 : i32
    %c0_i32_0 = arith.constant 0 : i32
    return %arg0, %c0_i32 : i32, i32
  }
  func.func @transform_1(%arg0: i32) -> (i32, i32) {
    %c0_i32 = arith.constant 0 : i32
    %c0_i32_0 = arith.constant 0 : i32
    return %arg0, %c0_i32 : i32, i32
  }
  func.func @transform_2(%arg0: i32) -> (i32, i32) {
    %c0_i32 = arith.constant 0 : i32
    %c0_i32_0 = arith.constant 0 : i32
    %c0_i32_1 = arith.constant 0 : i32
    return %c0_i32, %c0_i32_0 : i32, i32
  }
  func.func @transform_3(%arg0: i32) -> (i32, i32) {
    %c0_i32 = arith.constant 0 : i32
    %c0_i32_0 = arith.constant 0 : i32
    return %arg0, %c0_i32 : i32, i32
  }
}

</mosaic_0001>

<llo_original>
// kernel: tpu_custom_call.1
$region0: #{tpu_custom_call.1}
  #allocation0 [shape = 'u32[]', space=smem, size = 0x4, offset = 0x4, fixed_abs, tag = 'smem constant byte address 0x4 - core index']
  #allocation1 [shape = 'u32[144,128]{1,0:T(1,128)}', space=vmem, size = 0x12000, scoped, tag = 'internal scratch']
  %s0 = inlined_call_operand.vmem [shape: f32[128,128], index: 0, kind: input, shape index: {}]
  %s1 = inlined_call_operand.vmem [shape: f32[128,1], index: 1, kind: input, shape index: {}]
  %s2 = inlined_call_operand.hbm [shape: f32[128,128], index: 2, kind: input, shape index: {}]
  %s3 = inlined_call_operand.hbm [shape: bf16[128,128], index: 3, kind: output, shape index: {}]
  %s4 = sld [smem:[#allocation0]]
  $region26: #{tpu_custom_call.1} parent=0
    _
  %s6 = ssub.s32 1, %s4
  %s7 = scalar_select 0, %s6, %s4
  $region1: #{tpu_custom_call.1} parent=0
    #allocation2 [shape = 'u8[65536]{0}', space=vmem, size = 0x10000, scoped, tag = 'input window, operand 2, single buffered']
    #allocation3 [shape = 's32[1]{0}', space=sflag, size = 0x4, scoped, tag = 'scoped memory for tpu_custom_call.1']
    #allocation4 [shape = 's32[1]{0}', space=sflag, size = 0x4, scoped, tag = 'scoped memory for tpu_custom_call.1']
    #allocation5 [shape = 'u8[32768]{0}', space=vmem, size = 0x8000, scoped, tag = 'output window, operand 0, single buffered']
    %8 = vsyncpa [#allocation3], 0
    %9 = vsyncpa [#allocation4], 0
    // Predicated region
    $region2: #{tpu_custom_call.1} parent=1 // pred_check
      _
    $region3: #{tpu_custom_call.1} parent=1 // pred_check_branch
      %11 = sbr.rel (0) target = $region5
    $region4: #{tpu_custom_call.1} parent=1 // pred_region
      _
    $region5: #{tpu_custom_call.1} parent=1 // pred_fallthru
      _
    // Predicated region
    $region6: #{tpu_custom_call.1} parent=1 // pred_check
      _
    $region7: #{tpu_custom_call.1} parent=1 // pred_check_branch
      %13 = sbr.rel (0) target = $region9
    $region8: #{tpu_custom_call.1} parent=1 // pred_region
      _
    $region9: #{tpu_custom_call.1} parent=1 // pred_fallthru
      _
    // Predicated region
    $region10: #{tpu_custom_call.1} parent=1 // pred_check
      _
    $region11: #{tpu_custom_call.1} parent=1 // pred_check_branch
      %15 = sbr.rel (0) target = $region13
    $region12: #{tpu_custom_call.1} parent=1 // pred_region
      %s17 = ssub.s32 2048, 2048
      %18 = vsyncadd [#allocation3], %s17
      %s19 = sshll.u32 [#allocation2], 4
      %s20 = int_to_ptr.vmem [resolvable:$true] %s19
      %25 = dma.hbm_to_vmem [thread:$0]  %s2, 2048, %s20, [#allocation3], 128, 128, 8
    $region13: #{tpu_custom_call.1} parent=1 // pred_fallthru
      _
    // Predicated region
    $region14: #{tpu_custom_call.1} parent=1 // pred_check
      _
    $region15: #{tpu_custom_call.1} parent=1 // pred_check_branch
      %27 = sbr.rel (0) target = $region17
    $region16: #{tpu_custom_call.1} parent=1 // pred_region
      %28 = dma.done [#allocation3], 2048
    $region17: #{tpu_custom_call.1} parent=1 // pred_fallthru
      _
    %v29 = vld [vmem:[%s0] sm:$0xff]
    %v30 = vld [vmem:[%s0 + $0x8] sm:$0xff]
    %v31 = vld [vmem:[%s0 + $0x10] sm:$0xff]
    %v32 = vld [vmem:[%s0 + $0x18] sm:$0xff]
    %v33 = vld [vmem:[%s0 + $0x20] sm:$0xff]
    %v34 = vld [vmem:[%s0 + $0x28] sm:$0xff]
    %v35 = vld [vmem:[%s0 + $0x30] sm:$0xff]
    %v36 = vld [vmem:[%s0 + $0x38] sm:$0xff]
    %v37 = vld [vmem:[%s0 + $0x40] sm:$0xff]
    %v38 = vld [vmem:[%s0 + $0x48] sm:$0xff]
    %v39 = vld [vmem:[%s0 + $0x50] sm:$0xff]
    %v40 = vld [vmem:[%s0 + $0x58] sm:$0xff]
    %v41 = vld [vmem:[%s0 + $0x60] sm:$0xff]
    %v42 = vld [vmem:[%s0 + $0x68] sm:$0xff]
    %v43 = vld [vmem:[%s0 + $0x70] sm:$0xff]
    %v44 = vld [vmem:[%s0 + $0x78] sm:$0xff]
    %v45 = vld [vmem:[%s1] sm:$0xff]
    %v46 = vld [vmem:[%s1 + $0x8] sm:$0xff]
    %v47 = vld [vmem:[%s1 + $0x10] sm:$0xff]
    %v48 = vld [vmem:[%s1 + $0x18] sm:$0xff]
    %v49 = vld [vmem:[%s1 + $0x20] sm:$0xff]
    %v50 = vld [vmem:[%s1 + $0x28] sm:$0xff]
    %v51 = vld [vmem:[%s1 + $0x30] sm:$0xff]
    %v52 = vld [vmem:[%s1 + $0x38] sm:$0xff]
    %v53 = vld [vmem:[%s1 + $0x40] sm:$0xff]
    %v54 = vld [vmem:[%s1 + $0x48] sm:$0xff]
    %v55 = vld [vmem:[%s1 + $0x50] sm:$0xff]
    %v56 = vld [vmem:[%s1 + $0x58] sm:$0xff]
    %v57 = vld [vmem:[%s1 + $0x60] sm:$0xff]
    %v58 = vld [vmem:[%s1 + $0x68] sm:$0xff]
    %v59 = vld [vmem:[%s1 + $0x70] sm:$0xff]
    %v60 = vld [vmem:[%s1 + $0x78] sm:$0xff]
    %62 = vset.pattern.permute.xlu0 0
    %63 = vperm.xlu0 %62, %v45
    %v64 = vpop.permute.xlu0 %63
    %67 = vset.pattern.permute.xlu0 0
    %68 = vperm.xlu0 %67, %v46
    %v69 = vpop.permute.xlu0 %68
    %72 = vset.pattern.permute.xlu0 0
    %73 = vperm.xlu0 %72, %v47
    %v74 = vpop.permute.xlu0 %73
    %77 = vset.pattern.permute.xlu0 0
    %78 = vperm.xlu0 %77, %v48
    %v79 = vpop.permute.xlu0 %78
    %82 = vset.pattern.permute.xlu0 0
    %83 = vperm.xlu0 %82, %v49
    %v84 = vpop.permute.xlu0 %83
    %87 = vset.pattern.permute.xlu0 0
    %88 = vperm.xlu0 %87, %v50
    %v89 = vpop.permute.xlu0 %88
    %92 = vset.pattern.permute.xlu0 0
    %93 = vperm.xlu0 %92, %v51
    %v94 = vpop.permute.xlu0 %93
    %97 = vset.pattern.permute.xlu0 0
    %98 = vperm.xlu0 %97, %v52
    %v99 = vpop.permute.xlu0 %98
    %102 = vset.pattern.permute.xlu0 0
    %103 = vperm.xlu0 %102, %v53
    %v104 = vpop.permute.xlu0 %103
    %107 = vset.pattern.permute.xlu0 0
    %108 = vperm.xlu0 %107, %v54
    %v109 = vpop.permute.xlu0 %108
    %112 = vset.pattern.permute.xlu0 0
    %113 = vperm.xlu0 %112, %v55
    %v114 = vpop.permute.xlu0 %113
    %117 = vset.pattern.permute.xlu0 0
    %118 = vperm.xlu0 %117, %v56
    %v119 = vpop.permute.xlu0 %118
    %122 = vset.pattern.permute.xlu0 0
    %123 = vperm.xlu0 %122, %v57
    %v124 = vpop.permute.xlu0 %123
    %127 = vset.pattern.permute.xlu0 0
    %128 = vperm.xlu0 %127, %v58
    %v129 = vpop.permute.xlu0 %128
    %132 = vset.pattern.permute.xlu0 0
    %133 = vperm.xlu0 %132, %v59
    %v134 = vpop.permute.xlu0 %133
    %137 = vset.pattern.permute.xlu0 0
    %138 = vperm.xlu0 %137, %v60
    %v139 = vpop.permute.xlu0 %138
    %v141 = vmul.f32 %v29, %v64
    %v142 = vmul.f32 %v30, %v69
    %v143 = vmul.f32 %v31, %v74
    %v144 = vmul.f32 %v32, %v79
    %v145 = vmul.f32 %v33, %v84
    %v146 = vmul.f32 %v34, %v89
    %v147 = vmul.f32 %v35, %v94
    %v148 = vmul.f32 %v36, %v99
    %v149 = vmul.f32 %v37, %v104
    %v150 = vmul.f32 %v38, %v109
    %v151 = vmul.f32 %v39, %v114
    %v152 = vmul.f32 %v40, %v119
    %v153 = vmul.f32 %v41, %v124
    %v154 = vmul.f32 %v42, %v129
    %v155 = vmul.f32 %v43, %v134
    %v156 = vmul.f32 %v44, %v139
    %v157 = vld [vmem:[#allocation2] sm:$0xff]
    %v158 = vld [vmem:[#allocation2 + $0x8] sm:$0xff]
    %v159 = vld [vmem:[#allocation2 + $0x10] sm:$0xff]
    %v160 = vld [vmem:[#allocation2 + $0x18] sm:$0xff]
    %v161 = vld [vmem:[#allocation2 + $0x20] sm:$0xff]
    %v162 = vld [vmem:[#allocation2 + $0x28] sm:$0xff]
    %v163 = vld [vmem:[#allocation2 + $0x30] sm:$0xff]
    %v164 = vld [vmem:[#allocation2 + $0x38] sm:$0xff]
    %v165 = vld [vmem:[#allocation2 + $0x40] sm:$0xff]
    %v166 = vld [vmem:[#allocation2 + $0x48] sm:$0xff]
    %v167 = vld [vmem:[#allocation2 + $0x50] sm:$0xff]
    %v168 = vld [vmem:[#allocation2 + $0x58] sm:$0xff]
    %v169 = vld [vmem:[#allocation2 + $0x60] sm:$0xff]
    %v170 = vld [vmem:[#allocation2 + $0x68] sm:$0xff]
    %v171 = vld [vmem:[#allocation2 + $0x70] sm:$0xff]
    %v172 = vld [vmem:[#allocation2 + $0x78] sm:$0xff]
    %173 = vmatprep.subr.mxu0 0.0
    %174 = vmatpush1.msra.mxu0 %v172
    %175 = vmatprep.subr.mxu0 0.0
    %176 = vmatpush1.msra.mxu0 %v171
    %177 = vmatprep.subr.mxu0 0.0
    %178 = vmatpush1.msra.mxu0 %v170
    %179 = vmatprep.subr.mxu0 0.0
    %180 = vmatpush1.msra.mxu0 %v169
    %181 = vmatprep.subr.mxu0 0.0
    %182 = vmatpush1.msra.mxu0 %v168
    %183 = vmatprep.subr.mxu0 0.0
    %184 = vmatpush1.msra.mxu0 %v167
    %185 = vmatprep.subr.mxu0 0.0
    %186 = vmatpush1.msra.mxu0 %v166
    %187 = vmatprep.subr.mxu0 0.0
    %188 = vmatpush1.msra.mxu0 %v165
    %189 = vmatprep.subr.mxu0 0.0
    %190 = vmatpush1.msra.mxu0 %v164
    %191 = vmatprep.subr.mxu0 0.0
    %192 = vmatpush1.msra.mxu0 %v163
    %193 = vmatprep.subr.mxu0 0.0
    %194 = vmatpush1.msra.mxu0 %v162
    %195 = vmatprep.subr.mxu0 0.0
    %196 = vmatpush1.msra.mxu0 %v161
    %197 = vmatprep.subr.mxu0 0.0
    %198 = vmatpush1.msra.mxu0 %v160
    %199 = vmatprep.subr.mxu0 0.0
    %200 = vmatpush1.msra.mxu0 %v159
    %201 = vmatprep.subr.mxu0 0.0
    %202 = vmatpush1.msra.mxu0 %v158
    %203 = vmatprep.subr.mxu0 0.0
    %204 = vmatpush1.msra.mxu0 %v157
    %205 = vmatprep.subr.mxu0 0.0
    %206 = vmatpush2.msra.mxu0 0.0
    %207 = vmatprep.subr.mxu0 0.0
    %208 = vmatpush2.msra.mxu0 0.0
    %209 = vmatprep.subr.mxu0 0.0
    %210 = vmatpush2.msra.mxu0 0.0
    %211 = vmatprep.subr.mxu0 0.0
    %212 = vmatpush2.msra.mxu0 0.0
    %213 = vmatprep.subr.mxu0 0.0
    %214 = vmatpush2.msra.mxu0 0.0
    %215 = vmatprep.subr.mxu0 0.0
    %216 = vmatpush2.msra.mxu0 0.0
    %217 = vmatprep.subr.mxu0 0.0
    %218 = vmatpush2.msra.mxu0 0.0
    %219 = vmatprep.subr.mxu0 0.0
    %220 = vmatpush2.msra.mxu0 0.0
    %221 = vmatprep.subr.mxu0 0.0
    %222 = vmatpush2.msra.mxu0 0.0
    %223 = vmatprep.subr.mxu0 0.0
    %224 = vmatpush2.msra.mxu0 0.0
    %225 = vmatprep.subr.mxu0 0.0
    %226 = vmatpush2.msra.mxu0 0.0
    %227 = vmatprep.subr.mxu0 0.0
    %228 = vmatpush2.msra.mxu0 0.0
    %229 = vmatprep.subr.mxu0 0.0
    %230 = vmatpush2.msra.mxu0 0.0
    %231 = vmatprep.subr.mxu0 0.0
    %232 = vmatpush2.msra.mxu0 0.0
    %233 = vmatprep.subr.mxu0 0.0
    %234 = vmatpush2.msra.mxu0 0.0
    %235 = vmatprep.subr.mxu0 0.0
    %236 = vmatpush2.msra.mxu0 0.0
    %237 = vmatprep.mubr.f32.mxu0 0.0
    %238 = vmatmul.mubr.f32.gmra.mxu0 %v141
    %v239 = vpop.f32.mrf.mxu0
    %v240 = vadd.f32 0.0, %v239
    %v241 = vpop.f32.mrf.mxu0
    %242 = vmatprep.mubr.f32.mxu0 0.0
    %243 = vmatmul.mubr.f32.gmra.mxu0 %v142
    %v244 = vpop.f32.mrf.mxu0
    %v245 = vadd.f32 0.0, %v244
    %v246 = vpop.f32.mrf.mxu0
    %247 = vmatprep.mubr.f32.mxu0 0.0
    %248 = vmatmul.mubr.f32.gmra.mxu0 %v143
    %v249 = vpop.f32.mrf.mxu0
    %v250 = vadd.f32 0.0, %v249
    %v251 = vpop.f32.mrf.mxu0
    %252 = vmatprep.mubr.f32.mxu0 0.0
    %253 = vmatmul.mubr.f32.gmra.mxu0 %v144
    %v254 = vpop.f32.mrf.mxu0
    %v255 = vadd.f32 0.0, %v254
    %v256 = vpop.f32.mrf.mxu0
    %257 = vmatprep.mubr.f32.mxu0 0.0
    %258 = vmatmul.mubr.f32.gmra.mxu0 %v145
    %v259 = vpop.f32.mrf.mxu0
    %v260 = vadd.f32 0.0, %v259
    %v261 = vpop.f32.mrf.mxu0
    %262 = vmatprep.mubr.f32.mxu0 0.0
    %263 = vmatmul.mubr.f32.gmra.mxu0 %v146
    %v264 = vpop.f32.mrf.mxu0
    %v265 = vadd.f32 0.0, %v264
    %v266 = vpop.f32.mrf.mxu0
    %267 = vmatprep.mubr.f32.mxu0 0.0
    %268 = vmatmul.mubr.f32.gmra.mxu0 %v147
    %v269 = vpop.f32.mrf.mxu0
    %v270 = vadd.f32 0.0, %v269
    %v271 = vpop.f32.mrf.mxu0
    %272 = vmatprep.mubr.f32.mxu0 0.0
    %273 = vmatmul.mubr.f32.gmra.mxu0 %v148
    %v274 = vpop.f32.mrf.mxu0
    %v275 = vadd.f32 0.0, %v274
    %v276 = vpop.f32.mrf.mxu0
    %277 = vmatprep.mubr.f32.mxu0 0.0
    %278 = vmatmul.mubr.f32.gmra.mxu0 %v149
    %v279 = vpop.f32.mrf.mxu0
    %v280 = vadd.f32 0.0, %v279
    %v281 = vpop.f32.mrf.mxu0
    %282 = vmatprep.mubr.f32.mxu0 0.0
    %283 = vmatmul.mubr.f32.gmra.mxu0 %v150
    %v284 = vpop.f32.mrf.mxu0
    %v285 = vadd.f32 0.0, %v284
    %v286 = vpop.f32.mrf.mxu0
    %287 = vmatprep.mubr.f32.mxu0 0.0
    %288 = vmatmul.mubr.f32.gmra.mxu0 %v151
    %v289 = vpop.f32.mrf.mxu0
    %v290 = vadd.f32 0.0, %v289
    %v291 = vpop.f32.mrf.mxu0
    %292 = vmatprep.mubr.f32.mxu0 0.0
    %293 = vmatmul.mubr.f32.gmra.mxu0 %v152
    %v294 = vpop.f32.mrf.mxu0
    %v295 = vadd.f32 0.0, %v294
    %v296 = vpop.f32.mrf.mxu0
    %297 = vmatprep.mubr.f32.mxu0 0.0
    %298 = vmatmul.mubr.f32.gmra.mxu0 %v153
    %v299 = vpop.f32.mrf.mxu0
    %v300 = vadd.f32 0.0, %v299
    %v301 = vpop.f32.mrf.mxu0
    %302 = vmatprep.mubr.f32.mxu0 0.0
    %303 = vmatmul.mubr.f32.gmra.mxu0 %v154
    %v304 = vpop.f32.mrf.mxu0
    %v305 = vadd.f32 0.0, %v304
    %v306 = vpop.f32.mrf.mxu0
    %307 = vmatprep.mubr.f32.mxu0 0.0
    %308 = vmatmul.mubr.f32.gmra.mxu0 %v155
    %v309 = vpop.f32.mrf.mxu0
    %v310 = vadd.f32 0.0, %v309
    %v311 = vpop.f32.mrf.mxu0
    %312 = vmatprep.mubr.f32.mxu0 0.0
    %313 = vmatmul.mubr.f32.gmra.mxu0 %v156
    %v314 = vpop.f32.mrf.mxu0
    %v315 = vadd.f32 0.0, %v314
    %v316 = vpop.f32.mrf.mxu0
    %317 = vdwg.mxu0
    %v318 = vpack.c.bf16 %v245, %v240
    %v319 = vpack.c.bf16 %v255, %v250
    %v320 = vpack.c.bf16 %v265, %v260
    %v321 = vpack.c.bf16 %v275, %v270
    %v322 = vpack.c.bf16 %v285, %v280
    %v323 = vpack.c.bf16 %v295, %v290
    %v324 = vpack.c.bf16 %v305, %v300
    %v325 = vpack.c.bf16 %v315, %v310
    %v334 = vunpack.c.l.b16 %v318
    %v335 = vunpack.c.h.b16 %v318
    %v336 = vunpack.c.l.b16 %v319
    %v337 = vunpack.c.h.b16 %v319
    %v338 = vunpack.c.l.b16 %v320
    %v339 = vunpack.c.h.b16 %v320
    %v340 = vunpack.c.l.b16 %v321
    %v341 = vunpack.c.h.b16 %v321
    %v342 = vunpack.c.l.b16 %v322
    %v343 = vunpack.c.h.b16 %v322
    %v344 = vunpack.c.l.b16 %v323
    %v345 = vunpack.c.h.b16 %v323
    %v346 = vunpack.c.l.b16 %v324
    %v347 = vunpack.c.h.b16 %v324
    %v348 = vunpack.c.l.b16 %v325
    %v349 = vunpack.c.h.b16 %v325
    %v350 = vpack.c.b16 %v334, %v334
    %v351 = vpack.c.b16 %v335, %v335
    %v352 = vpack.c.b16 %v336, %v336
    %v353 = vpack.c.b16 %v337, %v337
    %v354 = vpack.c.b16 %v338, %v338
    %v355 = vpack.c.b16 %v339, %v339
    %v356 = vpack.c.b16 %v340, %v340
    %v357 = vpack.c.b16 %v341, %v341
    %v358 = vpack.c.b16 %v342, %v342
    %v359 = vpack.c.b16 %v343, %v343
    %v360 = vpack.c.b16 %v344, %v344
    %v361 = vpack.c.b16 %v345, %v345
    %v362 = vpack.c.b16 %v346, %v346
    %v363 = vpack.c.b16 %v347, %v347
    %v364 = vpack.c.b16 %v348, %v348
    %v365 = vpack.c.b16 %v349, %v349
    %382 = vst [vmem:[#allocation5] sm:$0xf] %v350
    %383 = vst [vmem:[#allocation5 + $0x4] sm:$0xf] %v351
    %384 = vst [vmem:[#allocation5 + $0x8] sm:$0xf] %v352
    %385 = vst [vmem:[#allocation5 + $0xc] sm:$0xf] %v353
    %386 = vst [vmem:[#allocation5 + $0x10] sm:$0xf] %v354
    %387 = vst [vmem:[#allocation5 + $0x14] sm:$0xf] %v355
    %388 = vst [vmem:[#allocation5 + $0x18] sm:$0xf] %v356
    %389 = vst [vmem:[#allocation5 + $0x1c] sm:$0xf] %v357
    %390 = vst [vmem:[#allocation5 + $0x20] sm:$0xf] %v358
    %391 = vst [vmem:[#allocation5 + $0x24] sm:$0xf] %v359
    %392 = vst [vmem:[#allocation5 + $0x28] sm:$0xf] %v360
    %393 = vst [vmem:[#allocation5 + $0x2c] sm:$0xf] %v361
    %394 = vst [vmem:[#allocation5 + $0x30] sm:$0xf] %v362
    %395 = vst [vmem:[#allocation5 + $0x34] sm:$0xf] %v363
    %396 = vst [vmem:[#allocation5 + $0x38] sm:$0xf] %v364
    %397 = vst [vmem:[#allocation5 + $0x3c] sm:$0xf] %v365
    // Predicated region
    $region18: #{tpu_custom_call.1} parent=1 // pred_check
      _
    $region19: #{tpu_custom_call.1} parent=1 // pred_check_branch
      %399 = sbr.rel (0) target = $region21
    $region20: #{tpu_custom_call.1} parent=1 // pred_region
      %s401 = ssub.s32 1024, 1024
      %402 = vsyncadd [#allocation4], %s401
      %s403 = sshll.u32 [#allocation5], 4
      %s404 = int_to_ptr.vmem [resolvable:$true] %s403
      %409 = dma.vmem_to_hbm [thread:$0]  %s404, 1024, %s3, [#allocation4], 64, 64, 4
    $region21: #{tpu_custom_call.1} parent=1 // pred_fallthru
      _
    // Predicated region
    $region22: #{tpu_custom_call.1} parent=1 // pred_check
      _
    $region23: #{tpu_custom_call.1} parent=1 // pred_check_branch
      %411 = sbr.rel (0) target = $region25
    $region24: #{tpu_custom_call.1} parent=1 // pred_region
      %412 = dma.done [#allocation4], 1024
    $region25: #{tpu_custom_call.1} parent=1 // pred_fallthru
      _
    %413 = vsyncpa [#allocation3], 1
    %414 = vsyncpa [#allocation4], 1

</llo_original>
